<compile_context>
chip_gen: v7x
topology: tpu7x:2x2x1
jax: 0.10.0
libtpu: 0.0.40
codegen_flags: <defaults>
</compile_context>

<pallas_src>
import functools
import math

import jax
import jax.numpy as jnp
from jax.experimental import pallas as pl
from jax.experimental.pallas import tpu as pltpu

LANE = 128
SUBLANE = 8
DEFAULT_TILE_B = 1024   # rows per grid step; sweep 512/1024/2048/4096 per chip


def _round_up(x, m):
    return (x + m - 1) // m * m


def _cdiv(a, b):
    return -(-a // b)


def _choose_tiling(B, tile_b):
    """Balanced batch tiling.

    - tile is a multiple of 8 sublanes,
    - >= 2 tiles whenever the batch allows it (megacore sharding on v7x),
    - tiles are balanced so an unlucky B (e.g. 260) does not pad ~2x.
    """
    target = max(SUBLANE, min(_round_up(tile_b, SUBLANE), _round_up(B, SUBLANE)))
    n_tiles = max(1, _cdiv(B, target))
    if B >= 2 * SUBLANE:
        n_tiles = max(n_tiles, 2)
    tb = _round_up(_cdiv(B, n_tiles), SUBLANE)
    n_tiles = _cdiv(B, tb)
    return tb, n_tiles, n_tiles * tb


# -----------------------------------------------------------------------------
# Shared fused MLP core (runs on one (tb, .) activation tile inside a kernel)
# -----------------------------------------------------------------------------
def _velocity_mlp(z, extra, w1z_ref, b1_ref, w2_ref, b2_ref, w3_ref, b3_ref):
    """FlowNN velocity: bf16 MXU operands, f32 accumulation, EUP SiLU.

    `extra` is everything besides z@W1z that feeds layer-1 pre-activation
    (cond projection + t term); passing it in lets the RK4 kernel hoist the
    cond projection out of the integration loop.
    Returns the compact (tb, latent_dim) velocity in f32.
    """
    bf16, f32 = jnp.bfloat16, jnp.float32
    h = jnp.dot(z.astype(bf16), w1z_ref[...], preferred_element_type=f32)
    h = h + extra + b1_ref[...]
    h = h * pl.reciprocal(1.0 + jnp.exp(-h), approx=True)      # SiLU on EUP
    h = jnp.dot(h.astype(bf16), w2_ref[...], preferred_element_type=f32)
    h = h + b2_ref[...]
    h = h * pl.reciprocal(1.0 + jnp.exp(-h), approx=True)
    v = jnp.dot(h.astype(bf16), w3_ref[...], preferred_element_type=f32)
    return v + b3_ref[...]


# -----------------------------------------------------------------------------
# Forward kernels (single velocity evaluation)
# -----------------------------------------------------------------------------
def _fwd_kernel_scalar_t(z_ref, t_ref, c_ref,
                         w1z_ref, w1t_ref, w1c_ref, b1_ref,
                         w2_ref, b2_ref, w3_ref, b3_ref, out_ref):
    bf16, f32 = jnp.bfloat16, jnp.float32
    extra = jnp.dot(c_ref[...].astype(bf16), w1c_ref[...],
                    preferred_element_type=f32)
    extra = extra + t_ref[0] * w1t_ref[...]                    # scalar t from SMEM
    v = _velocity_mlp(z_ref[...], extra, w1z_ref, b1_ref, w2_ref, b2_ref,
                      w3_ref, b3_ref)
    out_ref[...] = v.astype(out_ref.dtype)


def _fwd_kernel_batch_t(z_ref, t_ref, c_ref,
                        w1z_ref, w1t_ref, w1c_ref, b1_ref,
                        w2_ref, b2_ref, w3_ref, b3_ref, out_ref):
    bf16, f32 = jnp.bfloat16, jnp.float32
    extra = jnp.dot(c_ref[...].astype(bf16), w1c_ref[...],
                    preferred_element_type=f32)
    extra = extra + t_ref[...] * w1t_ref[...]                  # (tb,1)*(1,H) VPU
    v = _velocity_mlp(z_ref[...], extra, w1z_ref, b1_ref, w2_ref, b2_ref,
                      w3_ref, b3_ref)
    out_ref[...] = v.astype(out_ref.dtype)


# -----------------------------------------------------------------------------
# Forward wrapper (batched, tiled pallas_call)
# -----------------------------------------------------------------------------
@functools.partial(jax.jit, static_argnames=("tile_b", "scalar_t"))
def flownn_apply(z, t_arr, cond, kernel_params, *, tile_b=DEFAULT_TILE_B,
                 scalar_t=False):
    """z: (B, L) f32, cond: (B, C) f32 -> velocity (B, L) f32.

    scalar_t=True : t_arr has a single element, broadcast in-kernel from SMEM.
    scalar_t=False: t_arr is (B,) per-sample time, tiled with the batch.
    """
    w1z, w1t, w1c, b1, w2, b2, w3, b3 = kernel_params
    B, latent_dim = z.shape
    n_cond = cond.shape[1]
    H_P = w2.shape[0]

    tb, n_tiles, B_pad = _choose_tiling(B, tile_b)
    if B_pad != B:
        z = jnp.pad(z, ((0, B_pad - B), (0, 0)))
        cond = jnp.pad(cond, ((0, B_pad - B), (0, 0)))

    def idx_row(i):
        return (i, 0)

    def idx_const(i):
        return (0, 0)

    def row(feat):
        return pl.BlockSpec((tb, feat), idx_row)

    def resident(a):   # full array, constant block index -> stays in VMEM
        return pl.BlockSpec(a.shape, idx_const)

    if scalar_t:
        kernel = _fwd_kernel_scalar_t
        t_in = jnp.reshape(t_arr, (1,)).astype(jnp.float32)
        t_spec = pl.BlockSpec(memory_space=pltpu.MemorySpace.SMEM)
    else:
        kernel = _fwd_kernel_batch_t
        t_col = t_arr.astype(jnp.float32)[:, None]
        if B_pad != B:
            t_col = jnp.pad(t_col, ((0, B_pad - B), (0, 0)))
        t_in = t_col
        t_spec = row(1)

    weight_bytes = sum(int(p.size) * p.dtype.itemsize for p in kernel_params)
    flops = 2 * B_pad * H_P * (latent_dim + n_cond + H_P + latent_dim) + 6 * B_pad * H_P
    transcendentals = 2 * B_pad * H_P
    bytes_accessed = (4 * B_pad * (2 * latent_dim + n_cond) + weight_bytes
                      + 4 * int(t_in.size))
    cost = pl.CostEstimate(flops=int(flops), transcendentals=int(transcendentals),
                           bytes_accessed=int(bytes_accessed))

    out = pl.pallas_call(
        kernel,
        # Compact output: last dim == full array dim, so the (8,128) tiling
        # rule is satisfied while HBM writeback drops ~16x vs 128-lane padding.
        out_shape=jax.ShapeDtypeStruct((B_pad, latent_dim), jnp.float32),
        grid_spec=pltpu.PrefetchScalarGridSpec(
            num_scalar_prefetch=0,
            grid=(n_tiles,),
            in_specs=[row(latent_dim), t_spec, row(n_cond),
                      resident(w1z), resident(w1t), resident(w1c), resident(b1),
                      resident(w2), resident(b2), resident(w3), resident(b3)],
            out_specs=pl.BlockSpec((tb, latent_dim), idx_row),
        ),
        compiler_params=pltpu.CompilerParams(
            dimension_semantics=("parallel",),   # shard batch tiles across TCs
        ),
        cost_estimate=cost,
    )(z, t_in, cond, w1z, w1t, w1c, b1, w2, b2, w3, b3)

    return out[:B]


# -----------------------------------------------------------------------------
# Fused fixed-step RK4 integrator (decode/encode hot loop in ONE pallas_call)
# -----------------------------------------------------------------------------
def _make_rk4_kernel(n_steps, t0, t1):
    dt = float(t1 - t0) / float(n_steps - 1)

    def kernel(z0_ref, c_ref, w1z_ref, w1t_ref, w1c_ref, b1_ref,
               w2_ref, b2_ref, w3_ref, b3_ref, out_ref):
        bf16, f32 = jnp.bfloat16, jnp.float32
        w1t = w1t_ref[...]
        # cond's layer-1 contribution is constant over every velocity eval of
        # the trajectory — compute it once, outside the integration loop.
        c_proj = jnp.dot(c_ref[...].astype(bf16), w1c_ref[...],
                         preferred_element_type=f32)

        def vel(zz, tt):
            return _velocity_mlp(zz, c_proj + tt * w1t, w1z_ref, b1_ref,
                                 w2_ref, b2_ref, w3_ref, b3_ref)

        def step(_, carry):
            zz, tt = carry
            # torchdiffeq's fixed-grid 'rk4' solver = Kutta's 3/8-rule step.
            k1 = vel(zz, tt)
            k2 = vel(zz + dt * k1 * (1.0 / 3.0), tt + dt * (1.0 / 3.0))
            k3 = vel(zz + dt * (k2 - k1 * (1.0 / 3.0)), tt + dt * (2.0 / 3.0))
            k4 = vel(zz + dt * (k1 - k2 + k3), tt + dt)
            zz = zz + dt * 0.125 * (k1 + 3.0 * (k2 + k3) + k4)
            return zz, tt + dt

        z = z0_ref[...].astype(f32)
        z, _ = jax.lax.fori_loop(0, n_steps - 1, step, (z, jnp.float32(t0)))
        out_ref[...] = z.astype(out_ref.dtype)

    return kernel


@functools.partial(jax.jit, static_argnames=("n_steps", "t0", "t1", "tile_b"))
def flownn_rk4_integrate(z0, cond, kernel_params, *, n_steps, t0, t1,
                         tile_b=DEFAULT_TILE_B):
    """Integrate dz/dt = v(z,t,cond) from t0 to t1 with (n_steps-1) RK4 steps,
    entirely inside one pallas_call (weights VMEM-resident for the whole
    trajectory)."""
    w1z, w1t, w1c, b1, w2, b2, w3, b3 = kernel_params
    B, latent_dim = z0.shape
    n_cond = cond.shape[1]
    H_P = w2.shape[0]

    tb, n_tiles, B_pad = _choose_tiling(B, tile_b)
    if B_pad != B:
        z0 = jnp.pad(z0, ((0, B_pad - B), (0, 0)))
        cond = jnp.pad(cond, ((0, B_pad - B), (0, 0)))

    def idx_row(i):
        return (i, 0)

    def idx_const(i):
        return (0, 0)

    n_evals = 4 * (n_steps - 1)
    weight_bytes = sum(int(p.size) * p.dtype.itemsize for p in kernel_params)
    flops = (n_evals * 2 * B_pad * H_P * (latent_dim + H_P + latent_dim)
             + 2 * B_pad * n_cond * H_P)
    cost = pl.CostEstimate(
        flops=int(flops),
        transcendentals=int(n_evals * 2 * B_pad * H_P),
        bytes_accessed=int(4 * B_pad * (2 * latent_dim + n_cond) + weight_bytes))

    out = pl.pallas_call(
        _make_rk4_kernel(n_steps, float(t0), float(t1)),
        out_shape=jax.ShapeDtypeStruct((B_pad, latent_dim), jnp.float32),
        grid_spec=pltpu.PrefetchScalarGridSpec(
            num_scalar_prefetch=0,
            grid=(n_tiles,),
            in_specs=[pl.BlockSpec((tb, latent_dim), idx_row),
                      pl.BlockSpec((tb, n_cond), idx_row),
                      pl.BlockSpec(w1z.shape, idx_const),
                      pl.BlockSpec(w1t.shape, idx_const),
                      pl.BlockSpec(w1c.shape, idx_const),
                      pl.BlockSpec(b1.shape, idx_const),
                      pl.BlockSpec(w2.shape, idx_const),
                      pl.BlockSpec(b2.shape, idx_const),
                      pl.BlockSpec(w3.shape, idx_const),
                      pl.BlockSpec(b3.shape, idx_const)],
            out_specs=pl.BlockSpec((tb, latent_dim), idx_row),
        ),
        compiler_params=pltpu.CompilerParams(dimension_semantics=("parallel",)),
        cost_estimate=cost,
    )(z0, cond, w1z, w1t, w1c, b1, w2, b2, w3, b3)
    return out[:B]


# -----------------------------------------------------------------------------
# Parameters: PyTorch-style init + packing for the kernel
# -----------------------------------------------------------------------------
def init_flownn_params(key, latent_dim, n_cond, hidden):
    """f32 'logical' parameters; W stored (in_features, out_features)."""
    in_dim = latent_dim + 1 + n_cond
    dims = [(in_dim, hidden), (hidden, hidden), (hidden, latent_dim)]
    params = []
    for i, (fan_in, fan_out) in enumerate(dims):
        kw, kb = jax.random.split(jax.random.fold_in(key, i))
        bound = 1.0 / math.sqrt(fan_in)
        w = jax.random.uniform(kw, (fan_in, fan_out), jnp.float32, -bound, bound)
        b = jax.random.uniform(kb, (fan_out,), jnp.float32, -bound, bound)
        params.append((w, b))
    return params


def pack_params_for_kernel(params_f32, latent_dim, n_cond, hidden):
    """Split W1 by input block ([z | t | cond]); pad the hidden dim to 128
    lanes; keep the output dim compact (latent_dim); weights in bf16 (MXU),
    biases and the tiny t-row in f32."""
    (w1, b1), (w2, b2), (w3, b3) = params_f32
    H_P = _round_up(hidden, LANE)

    w1z = w1[:latent_dim]                  # rows acting on z
    w1t = w1[latent_dim:latent_dim + 1]    # row acting on t
    w1c = w1[latent_dim + 1:]              # rows acting on cond

    def pad_cols(a, cols):
        return jnp.pad(a, ((0, 0), (0, cols - a.shape[1])))

    def pad_rows(a, rows):
        return jnp.pad(a, ((0, rows - a.shape[0]), (0, 0)))

    return (
        pad_cols(w1z, H_P).astype(jnp.bfloat16),               # (L, H_P)
        pad_cols(w1t, H_P).astype(jnp.float32),                # (1, H_P)  f32
        pad_cols(w1c, H_P).astype(jnp.bfloat16),               # (C, H_P)
        pad_cols(b1[None, :], H_P).astype(jnp.float32),        # (1, H_P)
        pad_cols(pad_rows(w2, H_P), H_P).astype(jnp.bfloat16), # (H_P, H_P)
        pad_cols(b2[None, :], H_P).astype(jnp.float32),        # (1, H_P)
        pad_rows(w3, H_P).astype(jnp.bfloat16),                # (H_P, L) compact
        b3[None, :].astype(jnp.float32),                       # (1, L)
    )


# -----------------------------------------------------------------------------
# CondVF wrappers (forward / odefunc / decode / encode)
# -----------------------------------------------------------------------------
def cond_vf_forward(kernel_params, z, t, cond, *, tile_b=DEFAULT_TILE_B):
    """CondVF.forward: velocity (B, latent_dim). t is a scalar or (B,)."""
    B = z.shape[0]
    t = jnp.asarray(t, jnp.float32)
    if t.ndim == 0 or t.size == 1:   # scalar-t ODE path: t broadcast from SMEM
        return flownn_apply(z.astype(jnp.float32), jnp.reshape(t, (1,)),
                            cond.astype(jnp.float32), kernel_params,
                            tile_b=tile_b, scalar_t=True)
    t_batch = jnp.broadcast_to(jnp.reshape(t, (-1,)), (B,))
    return flownn_apply(z.astype(jnp.float32), t_batch,
                        cond.astype(jnp.float32), kernel_params,
                        tile_b=tile_b, scalar_t=False)


def cond_vf_odefunc(kernel_params, t_scalar, z_flat, cond):
    """Mirrors CondVF.odefunc: flat z in, flat velocity out."""
    B = cond.shape[0]
    latent_dim = z_flat.shape[0] // B
    z = z_flat.reshape(B, latent_dim)
    return cond_vf_forward(kernel_params, z, t_scalar, cond).reshape(-1)


def cond_vf_decode(kernel_params, cond, batch_size, latent_dim, key,
                   n_steps=50, *, tile_b=DEFAULT_TILE_B):
    """CondVF.decode: z0 ~ N(0,I), integrate t=0 -> 1 fully in-kernel."""
    z0 = jax.random.normal(key, (batch_size, latent_dim), jnp.float32)
    return flownn_rk4_integrate(z0, cond.astype(jnp.float32), kernel_params,
                                n_steps=n_steps, t0=0.0, t1=1.0, tile_b=tile_b)


def cond_vf_encode(kernel_params, z1, cond, n_steps=50, *, tile_b=DEFAULT_TILE_B):
    """CondVF.encode: integrate t=1 -> 0 fully in-kernel."""
    return flownn_rk4_integrate(z1.astype(jnp.float32),
                                cond.astype(jnp.float32), kernel_params,
                                n_steps=n_steps, t0=1.0, t1=0.0, tile_b=tile_b)

# TODO(synk): only the fixed-grid 'rk4' solver is fused; adaptive torchdiffeq
# methods (dopri5 etc.) need host-side step control and are not translated.


# -----------------------------------------------------------------------------
# Pure-JAX references for testing
# -----------------------------------------------------------------------------
def _mlp_mixed_ref(kernel_params, z, t_col, cond):
    """Mirror of the kernel math (bf16 MXU, f32 accumulation, exact sigmoid)."""
    w1z, w1t, w1c, b1, w2, b2, w3, b3 = kernel_params
    bf16, f32 = jnp.bfloat16, jnp.float32
    extra = jnp.dot(cond.astype(bf16), w1c, preferred_element_type=f32)
    extra = extra + t_col.astype(f32) * w1t
    h = jnp.dot(z.astype(bf16), w1z, preferred_element_type=f32)
    h = h + extra + b1
    h = h * (1.0 / (1.0 + jnp.exp(-h)))
    h = jnp.dot(h.astype(bf16), w2, preferred_element_type=f32) + b2
    h = h * (1.0 / (1.0 + jnp.exp(-h)))
    return jnp.dot(h.astype(bf16), w3, preferred_element_type=f32) + b3


def flownn_reference_mixed(kernel_params, z, t_batch, cond):
    return _mlp_mixed_ref(kernel_params, z, t_batch[:, None], cond)


def flownn_reference_f32(params_f32, z, t_batch, cond):
    """Original module math in full f32 (PyTorch FlowNN semantics)."""
    (w1, b1), (w2, b2), (w3, b3) = params_f32
    x = jnp.concatenate([z, t_batch[:, None], cond], axis=-1)
    h = jax.nn.silu(x @ w1 + b1)
    h = jax.nn.silu(h @ w2 + b2)
    return h @ w3 + b3


def rk4_reference_mixed(kernel_params, z0, cond, n_steps, t0, t1):
    """Mixed-precision 3/8-rule RK4 mirroring the fused integrator."""
    dt = float(t1 - t0) / float(n_steps - 1)
    B = z0.shape[0]

    def vel(zz, tt):
        t_col = jnp.full((B, 1), tt, jnp.float32)
        return _mlp_mixed_ref(kernel_params, zz, t_col, cond)

    z = z0
    t = jnp.float32(t0)
    for _ in range(n_steps - 1):
        k1 = vel(z, t)
        k2 = vel(z + dt * k1 * (1.0 / 3.0), t + dt * (1.0 / 3.0))
        k3 = vel(z + dt * (k2 - k1 * (1.0 / 3.0)), t + dt * (2.0 / 3.0))
        k4 = vel(z + dt * (k1 - k2 + k3), t + dt)
        z = z + dt * 0.125 * (k1 + 3.0 * (k2 + k3) + k4)
        t = t + dt
    return z


if __name__ == "__main__":
    B, latent_dim, n_cond, hidden = 2, 8, 4, 32

    key = jax.random.PRNGKey(0)
    k_params, k_z, k_cond = jax.random.split(key, 3)

    params_f32 = init_flownn_params(k_params, latent_dim, n_cond, hidden)
    kparams = pack_params_for_kernel(params_f32, latent_dim, n_cond, hidden)

    z = jax.random.normal(k_z, (B, latent_dim), jnp.float32)
    cond = jax.random.normal(k_cond, (B, n_cond), jnp.float32)
    t = jnp.float32(0.3)  # scalar t (SMEM broadcast path)

    v = jax.block_until_ready(cond_vf_forward(kparams, z, t, cond))
    assert v.shape == (B, latent_dim)

    t_b = jnp.full((B,), 0.3, jnp.float32)

    # Check 1: mirror of the kernel's mixed-precision math (approx-recip only diff).
    v_mirror = flownn_reference_mixed(kparams, z, t_b, cond)
    assert jnp.allclose(v, v_mirror, atol=2e-2, rtol=2e-2)

    # Check 2: full-f32 reference of the original module (bf16-level tolerance).
    v_f32 = flownn_reference_f32(params_f32, z, t_b, cond)
    assert jnp.allclose(v, v_f32, atol=5e-2, rtol=5e-2)

    # Check 3: per-sample-t path, multi-tile grid + balanced batch padding.
    B2 = 260
    kz2, kc2 = jax.random.split(jax.random.fold_in(key, 7))
    z2 = jax.random.normal(kz2, (B2, latent_dim), jnp.float32)
    c2 = jax.random.normal(kc2, (B2, n_cond), jnp.float32)
    t2 = jnp.linspace(0.0, 1.0, B2, dtype=jnp.float32)
    v2 = jax.block_until_ready(cond_vf_forward(kparams, z2, t2, c2))
    assert v2.shape == (B2, latent_dim)
    v2_mirror = flownn_reference_mixed(kparams, z2, t2, c2)
    assert jnp.allclose(v2, v2_mirror, atol=2e-2, rtol=2e-2)

    # Check 4: fused RK4 integration (decode-style) vs a pure-JAX mixed mirror.
    n_steps = 5
    z0 = jax.random.normal(jax.random.fold_in(key, 11), (B, latent_dim),
                           jnp.float32)
    z1 = jax.block_until_ready(
        flownn_rk4_integrate(z0, cond, kparams, n_steps=n_steps, t0=0.0, t1=1.0))
    assert z1.shape == (B, latent_dim)
    z1_ref = rk4_reference_mixed(kparams, z0, cond, n_steps, 0.0, 1.0)
    assert jnp.allclose(z1, z1_ref, atol=3e-2, rtol=3e-2)

    print("KERNEL_OK")
</pallas_src>

<mosaic_0001>
module attributes {stable_mosaic.version = 11 : i64} {
  func.func @_fwd_kernel_scalar_t(%arg0: i32, %arg1: memref<8x8xf32, #tpu.memory_space<vmem>>, %arg2: memref<1xf32, #tpu.memory_space<smem>>, %arg3: memref<8x4xf32, #tpu.memory_space<vmem>>, %arg4: memref<8x128xbf16, #tpu.memory_space<vmem>>, %arg5: memref<1x128xf32, #tpu.memory_space<vmem>>, %arg6: memref<4x128xbf16, #tpu.memory_space<vmem>>, %arg7: memref<1x128xf32, #tpu.memory_space<vmem>>, %arg8: memref<128x128xbf16, #tpu.memory_space<vmem>>, %arg9: memref<1x128xf32, #tpu.memory_space<vmem>>, %arg10: memref<128x8xbf16, #tpu.memory_space<vmem>>, %arg11: memref<1x8xf32, #tpu.memory_space<vmem>>, %arg12: memref<8x8xf32, #tpu.memory_space<vmem>>) attributes {dimension_semantics = [#tpu.dimension_semantics<parallel>], iteration_bounds = array<i64: 1>, scalar_prefetch = 0 : i64, scratch_operands = 0 : i64, tpu.core_type = #tpu.core_type<tc>, window_params = [{transform_indices = @transform_0, window_bounds = array<i64: 8, 8>}, {transform_indices = @transform_1, window_bounds = array<i64: 1>}, {transform_indices = @transform_2, window_bounds = array<i64: 8, 4>}, {pipeline_mode = #tpu.pipeline_mode<synchronous>, transform_indices = @transform_3, window_bounds = array<i64: 8, 128>}, {pipeline_mode = #tpu.pipeline_mode<synchronous>, transform_indices = @transform_4, window_bounds = array<i64: 1, 128>}, {pipeline_mode = #tpu.pipeline_mode<synchronous>, transform_indices = @transform_5, window_bounds = array<i64: 4, 128>}, {pipeline_mode = #tpu.pipeline_mode<synchronous>, transform_indices = @transform_6, window_bounds = array<i64: 1, 128>}, {pipeline_mode = #tpu.pipeline_mode<synchronous>, transform_indices = @transform_7, window_bounds = array<i64: 128, 128>}, {pipeline_mode = #tpu.pipeline_mode<synchronous>, transform_indices = @transform_8, window_bounds = array<i64: 1, 128>}, {pipeline_mode = #tpu.pipeline_mode<synchronous>, transform_indices = @transform_9, window_bounds = array<i64: 128, 8>}, {pipeline_mode = #tpu.pipeline_mode<synchronous>, transform_indices = @transform_10, window_bounds = array<i64: 1, 8>}, {transform_indices = @transform_11, window_bounds = array<i64: 8, 8>}]} {
    %c0 = arith.constant 0 : index
    %c0_0 = arith.constant 0 : index
    %0 = vector.load %arg3[%c0, %c0_0] : memref<8x4xf32, #tpu.memory_space<vmem>>, vector<8x4xf32>
    %1 = arith.truncf %0 : vector<8x4xf32> to vector<8x4xbf16>
    %c0_1 = arith.constant 0 : index
    %c0_2 = arith.constant 0 : index
    %2 = vector.load %arg6[%c0_1, %c0_2] : memref<4x128xbf16, #tpu.memory_space<vmem>>, vector<4x128xbf16>
    %cst = arith.constant dense<0.000000e+00> : vector<8x128xf32>
    %3 = tpu.matmul %1, %2, %cst {dimension_numbers = #tpu.dot_dimension_numbers<[1], [0], [0], [1], [0, 0, 1, 1], [], []>} : vector<8x4xbf16>, vector<4x128xbf16>, vector<8x128xf32> -> vector<8x128xf32>
    %c0_3 = arith.constant 0 : index
    %4 = memref.load %arg2[%c0_3] : memref<1xf32, #tpu.memory_space<smem>>
    %c0_4 = arith.constant 0 : index
    %c0_5 = arith.constant 0 : index
    %5 = vector.load %arg5[%c0_4, %c0_5] : memref<1x128xf32, #tpu.memory_space<vmem>>, vector<1x128xf32>
    %6 = vector.broadcast %4 : f32 to vector<1x128xf32>
    %7 = arith.mulf %6, %5 : vector<1x128xf32>
    %8 = vector.broadcast %7 : vector<1x128xf32> to vector<8x128xf32>
    %9 = arith.addf %3, %8 : vector<8x128xf32>
    %c0_6 = arith.constant 0 : index
    %c0_7 = arith.constant 0 : index
    %10 = vector.load %arg1[%c0_6, %c0_7] : memref<8x8xf32, #tpu.memory_space<vmem>>, vector<8x8xf32>
    %11 = arith.truncf %10 : vector<8x8xf32> to vector<8x8xbf16>
    %c0_8 = arith.constant 0 : index
    %c0_9 = arith.constant 0 : index
    %12 = vector.load %arg4[%c0_8, %c0_9] : memref<8x128xbf16, #tpu.memory_space<vmem>>, vector<8x128xbf16>
    %cst_10 = arith.constant dense<0.000000e+00> : vector<8x128xf32>
    %13 = tpu.matmul %11, %12, %cst_10 {dimension_numbers = #tpu.dot_dimension_numbers<[1], [0], [0], [1], [0, 0, 1, 1], [], []>} : vector<8x8xbf16>, vector<8x128xbf16>, vector<8x128xf32> -> vector<8x128xf32>
    %14 = arith.addf %13, %9 : vector<8x128xf32>
    %c0_11 = arith.constant 0 : index
    %c0_12 = arith.constant 0 : index
    %15 = vector.load %arg7[%c0_11, %c0_12] : memref<1x128xf32, #tpu.memory_space<vmem>>, vector<1x128xf32>
    %16 = vector.broadcast %15 : vector<1x128xf32> to vector<8x128xf32>
    %17 = arith.addf %14, %16 : vector<8x128xf32>
    %cst_13 = arith.constant 0.000000e+00 : f32
    %18 = vector.broadcast %cst_13 : f32 to vector<8x128xf32>
    %19 = arith.subf %18, %17 : vector<8x128xf32>
    %20 = math.exp %19 : vector<8x128xf32>
    %cst_14 = arith.constant 1.000000e+00 : f32
    %21 = vector.broadcast %cst_14 : f32 to vector<8x128xf32>
    %22 = arith.addf %21, %20 : vector<8x128xf32>
    %23 = tpu.reciprocal %22 {approx = true} : vector<8x128xf32> -> vector<8x128xf32>
    %24 = arith.mulf %17, %23 : vector<8x128xf32>
    %25 = arith.truncf %24 : vector<8x128xf32> to vector<8x128xbf16>
    %c0_15 = arith.constant 0 : index
    %c0_16 = arith.constant 0 : index
    %26 = vector.load %arg8[%c0_15, %c0_16] : memref<128x128xbf16, #tpu.memory_space<vmem>>, vector<128x128xbf16>
    %cst_17 = arith.constant dense<0.000000e+00> : vector<8x128xf32>
    %27 = tpu.matmul %25, %26, %cst_17 {dimension_numbers = #tpu.dot_dimension_numbers<[1], [0], [0], [1], [0, 0, 1, 1], [], []>} : vector<8x128xbf16>, vector<128x128xbf16>, vector<8x128xf32> -> vector<8x128xf32>
    %c0_18 = arith.constant 0 : index
    %c0_19 = arith.constant 0 : index
    %28 = vector.load %arg9[%c0_18, %c0_19] : memref<1x128xf32, #tpu.memory_space<vmem>>, vector<1x128xf32>
    %29 = vector.broadcast %28 : vector<1x128xf32> to vector<8x128xf32>
    %30 = arith.addf %27, %29 : vector<8x128xf32>
    %cst_20 = arith.constant 0.000000e+00 : f32
    %31 = vector.broadcast %cst_20 : f32 to vector<8x128xf32>
    %32 = arith.subf %31, %30 : vector<8x128xf32>
    %33 = math.exp %32 : vector<8x128xf32>
    %cst_21 = arith.constant 1.000000e+00 : f32
    %34 = vector.broadcast %cst_21 : f32 to vector<8x128xf32>
    %35 = arith.addf %34, %33 : vector<8x128xf32>
    %36 = tpu.reciprocal %35 {approx = true} : vector<8x128xf32> -> vector<8x128xf32>
    %37 = arith.mulf %30, %36 : vector<8x128xf32>
    %38 = arith.truncf %37 : vector<8x128xf32> to vector<8x128xbf16>
    %c0_22 = arith.constant 0 : index
    %c0_23 = arith.constant 0 : index
    %39 = vector.load %arg10[%c0_22, %c0_23] : memref<128x8xbf16, #tpu.memory_space<vmem>>, vector<128x8xbf16>
    %cst_24 = arith.constant dense<0.000000e+00> : vector<8x8xf32>
    %40 = tpu.matmul %38, %39, %cst_24 {dimension_numbers = #tpu.dot_dimension_numbers<[1], [0], [0], [1], [0, 0, 1, 1], [], []>} : vector<8x128xbf16>, vector<128x8xbf16>, vector<8x8xf32> -> vector<8x8xf32>
    %c0_25 = arith.constant 0 : index
    %c0_26 = arith.constant 0 : index
    %41 = vector.load %arg11[%c0_25, %c0_26] : memref<1x8xf32, #tpu.memory_space<vmem>>, vector<1x8xf32>
    %42 = vector.broadcast %41 : vector<1x8xf32> to vector<8x8xf32>
    %43 = arith.addf %40, %42 : vector<8x8xf32>
    %c0_27 = arith.constant 0 : index
    %c0_28 = arith.constant 0 : index
    %44 = vector.load %arg12[%c0_27, %c0_28] : memref<8x8xf32, #tpu.memory_space<vmem>>, vector<8x8xf32>
    tpu.vector_store %arg12[%c0_27, %c0_28], %43 {strides = array<i32>} : memref<8x8xf32, #tpu.memory_space<vmem>>, vector<8x8xf32>,
    return
  }
  func.func @transform_0(%arg0: i32) -> (i32, i32) {
    %c0_i32 = arith.constant 0 : i32
    %c0_i32_0 = arith.constant 0 : i32
    return %arg0, %c0_i32 : i32, i32
  }
  func.func @transform_1(%arg0: i32) -> i32 {
    %c0_i32 = arith.constant 0 : i32
    %c0_i32_0 = arith.constant 0 : i32
    return %c0_i32 : i32
  }
  func.func @transform_2(%arg0: i32) -> (i32, i32) {
    %c0_i32 = arith.constant 0 : i32
    %c0_i32_0 = arith.constant 0 : i32
    return %arg0, %c0_i32 : i32, i32
  }
  func.func @transform_3(%arg0: i32) -> (i32, i32) {
    %c0_i32 = arith.constant 0 : i32
    %c0_i32_0 = arith.constant 0 : i32
    %c0_i32_1 = arith.constant 0 : i32
    return %c0_i32, %c0_i32_0 : i32, i32
  }
  func.func @transform_4(%arg0: i32) -> (i32, i32) {
    %c0_i32 = arith.constant 0 : i32
    %c0_i32_0 = arith.constant 0 : i32
    %c0_i32_1 = arith.constant 0 : i32
    return %c0_i32, %c0_i32_0 : i32, i32
  }
  func.func @transform_5(%arg0: i32) -> (i32, i32) {
    %c0_i32 = arith.constant 0 : i32
    %c0_i32_0 = arith.constant 0 : i32
    %c0_i32_1 = arith.constant 0 : i32
    return %c0_i32, %c0_i32_0 : i32, i32
  }
  func.func @transform_6(%arg0: i32) -> (i32, i32) {
    %c0_i32 = arith.constant 0 : i32
    %c0_i32_0 = arith.constant 0 : i32
    %c0_i32_1 = arith.constant 0 : i32
    return %c0_i32, %c0_i32_0 : i32, i32
  }
  func.func @transform_7(%arg0: i32) -> (i32, i32) {
    %c0_i32 = arith.constant 0 : i32
    %c0_i32_0 = arith.constant 0 : i32
    %c0_i32_1 = arith.constant 0 : i32
    return %c0_i32, %c0_i32_0 : i32, i32
  }
  func.func @transform_8(%arg0: i32) -> (i32, i32) {
    %c0_i32 = arith.constant 0 : i32
    %c0_i32_0 = arith.constant 0 : i32
    %c0_i32_1 = arith.constant 0 : i32
    return %c0_i32, %c0_i32_0 : i32, i32
  }
  func.func @transform_9(%arg0: i32) -> (i32, i32) {
    %c0_i32 = arith.constant 0 : i32
    %c0_i32_0 = arith.constant 0 : i32
    %c0_i32_1 = arith.constant 0 : i32
    return %c0_i32, %c0_i32_0 : i32, i32
  }
  func.func @transform_10(%arg0: i32) -> (i32, i32) {
    %c0_i32 = arith.constant 0 : i32
    %c0_i32_0 = arith.constant 0 : i32
    %c0_i32_1 = arith.constant 0 : i32
    return %c0_i32, %c0_i32_0 : i32, i32
  }
  func.func @transform_11(%arg0: i32) -> (i32, i32) {
    %c0_i32 = arith.constant 0 : i32
    %c0_i32_0 = arith.constant 0 : i32
    return %arg0, %c0_i32 : i32, i32
  }
}

</mosaic_0001>

<llo_original>
// kernel: flownn_apply.1
$region0: #{flownn_apply.1}
  #allocation0 [shape = 'u32[]', space=smem, size = 0x4, offset = 0x4, fixed_abs, tag = 'smem constant byte address 0x4 - core index']
  #allocation1 [shape = 'u32[144,128]{1,0:T(1,128)}', space=vmem, size = 0x12000, scoped, tag = 'internal scratch']
  #allocation2 [shape = 'f32[1]{0:T(128)S(6)}', space=smem, size = 0x200, scoped, tag = 'scoped memory for flownn_apply.1']
  %s0 = inlined_call_operand.vmem [shape: f32[8,8], index: 0, kind: input, shape index: {}]
  %s1 = inlined_call_operand.<no memory space> [shape: f32[1], index: 1, kind: input, shape index: {}]
  %s2 = inlined_call_operand.vmem [shape: f32[8,4], index: 2, kind: input, shape index: {}]
  %s3 = inlined_call_operand.vmem [shape: bf16[8,128], index: 3, kind: input, shape index: {}]
  %s4 = inlined_call_operand.vmem [shape: f32[1,128], index: 4, kind: input, shape index: {}]
  %s5 = inlined_call_operand.vmem [shape: bf16[4,128], index: 5, kind: input, shape index: {}]
  %s6 = inlined_call_operand.vmem [shape: f32[1,128], index: 6, kind: input, shape index: {}]
  %s7 = inlined_call_operand.vmem [shape: bf16[128,128], index: 7, kind: input, shape index: {}]
  %s8 = inlined_call_operand.vmem [shape: f32[1,128], index: 8, kind: input, shape index: {}]
  %s9 = inlined_call_operand.vmem [shape: bf16[128,8], index: 9, kind: input, shape index: {}]
  %s10 = inlined_call_operand.vmem [shape: f32[1,8], index: 10, kind: input, shape index: {}]
  %s11 = inlined_call_operand.vmem [shape: f32[8,8], index: 11, kind: output, shape index: {}]
  %s12 = sld [smem:[#allocation0]]
  $region54: #{flownn_apply.1} parent=0
    _
  %s14 = ssub.s32 1, %s12
  %s15 = scalar_select 0, %s14, %s12
  %16 = sst [smem:[#allocation2]] %s1
  // Predicated region
  $region2: #{flownn_apply.1} parent=0 // pred_check
    _
  $region3: #{flownn_apply.1} parent=0 // pred_check_branch
    %18 = sbr.rel (0) target = $region5
  $region4: #{flownn_apply.1} parent=0 // pred_region
    _
  $region5: #{flownn_apply.1} parent=0 // pred_fallthru
    _
  // Predicated region
  $region6: #{flownn_apply.1} parent=0 // pred_check
    _
  $region7: #{flownn_apply.1} parent=0 // pred_check_branch
    %20 = sbr.rel (0) target = $region9
  $region8: #{flownn_apply.1} parent=0 // pred_region
    _
  $region9: #{flownn_apply.1} parent=0 // pred_fallthru
    _
  // Predicated region
  $region10: #{flownn_apply.1} parent=0 // pred_check
    _
  $region11: #{flownn_apply.1} parent=0 // pred_check_branch
    %22 = sbr.rel (0) target = $region13
  $region12: #{flownn_apply.1} parent=0 // pred_region
    _
  $region13: #{flownn_apply.1} parent=0 // pred_fallthru
    _
  // Predicated region
  $region14: #{flownn_apply.1} parent=0 // pred_check
    _
  $region15: #{flownn_apply.1} parent=0 // pred_check_branch
    %24 = sbr.rel (0) target = $region17
  $region16: #{flownn_apply.1} parent=0 // pred_region
    _
  $region17: #{flownn_apply.1} parent=0 // pred_fallthru
    _
  // Predicated region
  $region18: #{flownn_apply.1} parent=0 // pred_check
    _
  $region19: #{flownn_apply.1} parent=0 // pred_check_branch
    %26 = sbr.rel (0) target = $region21
  $region20: #{flownn_apply.1} parent=0 // pred_region
    _
  $region21: #{flownn_apply.1} parent=0 // pred_fallthru
    _
  // Predicated region
  $region22: #{flownn_apply.1} parent=0 // pred_check
    _
  $region23: #{flownn_apply.1} parent=0 // pred_check_branch
    %28 = sbr.rel (0) target = $region25
  $region24: #{flownn_apply.1} parent=0 // pred_region
    _
  $region25: #{flownn_apply.1} parent=0 // pred_fallthru
    _
  // Predicated region
  $region26: #{flownn_apply.1} parent=0 // pred_check
    _
  $region27: #{flownn_apply.1} parent=0 // pred_check_branch
    %30 = sbr.rel (0) target = $region29
  $region28: #{flownn_apply.1} parent=0 // pred_region
    _
  $region29: #{flownn_apply.1} parent=0 // pred_fallthru
    _
  // Predicated region
  $region30: #{flownn_apply.1} parent=0 // pred_check
    _
  $region31: #{flownn_apply.1} parent=0 // pred_check_branch
    %32 = sbr.rel (0) target = $region33
  $region32: #{flownn_apply.1} parent=0 // pred_region
    _
  $region33: #{flownn_apply.1} parent=0 // pred_fallthru
    _
  // Predicated region
  $region34: #{flownn_apply.1} parent=0 // pred_check
    _
  $region35: #{flownn_apply.1} parent=0 // pred_check_branch
    %34 = sbr.rel (0) target = $region37
  $region36: #{flownn_apply.1} parent=0 // pred_region
    _
  $region37: #{flownn_apply.1} parent=0 // pred_fallthru
    _
  // Predicated region
  $region38: #{flownn_apply.1} parent=0 // pred_check
    _
  $region39: #{flownn_apply.1} parent=0 // pred_check_branch
    %36 = sbr.rel (0) target = $region41
  $region40: #{flownn_apply.1} parent=0 // pred_region
    _
  $region41: #{flownn_apply.1} parent=0 // pred_fallthru
    _
  // Predicated region
  $region42: #{flownn_apply.1} parent=0 // pred_check
    _
  $region43: #{flownn_apply.1} parent=0 // pred_check_branch
    %38 = sbr.rel (0) target = $region45
  $region44: #{flownn_apply.1} parent=0 // pred_region
    _
  $region45: #{flownn_apply.1} parent=0 // pred_fallthru
    _
  %v40 = vld [vmem:[%s2] sm:$0xff]
  %v41 = vpack.c.bf16 %v40, %v40
  %v42 = vld [vmem:[%s5] sm:$0x3]
  %s43 = sld [smem:[#allocation2]]
  %v44 = vld [vmem:[%s4] sm:$0x1]
  %v45 = vstv %s43
  %v46 = vmul.f32 %v45, %v44
  %v48 = vlaneseq
  %v49 = vshrl.u32 %v48, 7
  %v50 = vsub.s32 0, %v49
  %v51 = vrot.slane %v46, %v50
  %vm53 = vcmask 31744
  %v55 = vsel %vm53, %v41, 0
  %vm57 = vcmask 1041408
  %v59 = vsel %vm57, %v42, 0
  %61 = vmatprep.subr.bf16.mxu0 0
  %62 = vmatpush1.bf16.msra.mxu0 %v59
  %63 = vmatprep.subr.bf16.mxu0 0
  %64 = vmatpush1.bf16.msra.mxu0 0
  %65 = vmatprep.subr.bf16.mxu0 0
  %66 = vmatpush1.bf16.msra.mxu0 0
  %67 = vmatprep.subr.bf16.mxu0 0
  %68 = vmatpush1.bf16.msra.mxu0 0
  %69 = vmatprep.subr.bf16.mxu0 0
  %70 = vmatpush1.bf16.msra.mxu0 0
  %71 = vmatprep.subr.bf16.mxu0 0
  %72 = vmatpush1.bf16.msra.mxu0 0
  %73 = vmatprep.subr.bf16.mxu0 0
  %74 = vmatpush1.bf16.msra.mxu0 0
  %75 = vmatprep.subr.bf16.mxu0 0
  %76 = vmatpush1.bf16.msra.mxu0 0
  %77 = vmatprep.subr.bf16.mxu0 0
  %78 = vmatpush1.bf16.msra.mxu0 0
  %79 = vmatprep.subr.bf16.mxu0 0
  %80 = vmatpush1.bf16.msra.mxu0 0
  %81 = vmatprep.subr.bf16.mxu0 0
  %82 = vmatpush1.bf16.msra.mxu0 0
  %83 = vmatprep.subr.bf16.mxu0 0
  %84 = vmatpush1.bf16.msra.mxu0 0
  %85 = vmatprep.subr.bf16.mxu0 0
  %86 = vmatpush1.bf16.msra.mxu0 0
  %87 = vmatprep.subr.bf16.mxu0 0
  %88 = vmatpush1.bf16.msra.mxu0 0
  %89 = vmatprep.subr.bf16.mxu0 0
  %90 = vmatpush1.bf16.msra.mxu0 0
  %91 = vmatprep.subr.bf16.mxu0 0
  %92 = vmatpush1.bf16.msra.mxu0 0
  %93 = vmatprep.mubr.bf16.mxu0 0
  %94 = vmatmul.mubr.bf16.gmra.mrb[0].mxu0 %v55
  %v95 = vpop.f32.mrb[0].mxu0
  %v96 = vadd.f32 %v51, %v95
  %v97 = vpop.f32.mrb[0].mxu0
  %v98 = vpop.f32.mrb[0].mxu0
  %v99 = vpop.f32.mrb[0].mxu0
  %100 = vdwg.mxu0
  %v101 = vld [vmem:[%s0] sm:$0xff]
  %v102 = vpack.c.bf16 %v101, %v101
  %v103 = vld [vmem:[%s3] sm:$0xf]
  %vm104 = vcmask 64512
  %v106 = vsel %vm104, %v102, 0
  %vm108 = vcmask 1043456
  %v110 = vsel %vm108, %v103, 0
  %112 = vmatprep.subr.bf16.mxu0 0
  %113 = vmatpush1.bf16.msra.mxu0 %v110
  %114 = vmatprep.subr.bf16.mxu0 0
  %115 = vmatpush1.bf16.msra.mxu0 0
  %116 = vmatprep.subr.bf16.mxu0 0
  %117 = vmatpush1.bf16.msra.mxu0 0
  %118 = vmatprep.subr.bf16.mxu0 0
  %119 = vmatpush1.bf16.msra.mxu0 0
  %120 = vmatprep.subr.bf16.mxu0 0
  %121 = vmatpush1.bf16.msra.mxu0 0
  %122 = vmatprep.subr.bf16.mxu0 0
  %123 = vmatpush1.bf16.msra.mxu0 0
  %124 = vmatprep.subr.bf16.mxu0 0
  %125 = vmatpush1.bf16.msra.mxu0 0
  %126 = vmatprep.subr.bf16.mxu0 0
  %127 = vmatpush1.bf16.msra.mxu0 0
  %128 = vmatprep.subr.bf16.mxu0 0
  %129 = vmatpush1.bf16.msra.mxu0 0
  %130 = vmatprep.subr.bf16.mxu0 0
  %131 = vmatpush1.bf16.msra.mxu0 0
  %132 = vmatprep.subr.bf16.mxu0 0
  %133 = vmatpush1.bf16.msra.mxu0 0
  %134 = vmatprep.subr.bf16.mxu0 0
  %135 = vmatpush1.bf16.msra.mxu0 0
  %136 = vmatprep.subr.bf16.mxu0 0
  %137 = vmatpush1.bf16.msra.mxu0 0
  %138 = vmatprep.subr.bf16.mxu0 0
  %139 = vmatpush1.bf16.msra.mxu0 0
  %140 = vmatprep.subr.bf16.mxu0 0
  %141 = vmatpush1.bf16.msra.mxu0 0
  %142 = vmatprep.subr.bf16.mxu0 0
  %143 = vmatpush1.bf16.msra.mxu0 0
  %144 = vmatprep.mubr.bf16.mxu0 0
  %145 = vmatmul.mubr.bf16.gmra.mrb[0].mxu0 %v106
  %v146 = vpop.f32.mrb[0].mxu0
  %v147 = vadd.f32 %v96, %v146
  %v148 = vpop.f32.mrb[0].mxu0
  %v149 = vpop.f32.mrb[0].mxu0
  %v150 = vpop.f32.mrb[0].mxu0
  %151 = vdwg.mxu0
  %v152 = vld [vmem:[%s6] sm:$0x1]
  %v154 = vlaneseq
  %v155 = vshrl.u32 %v154, 7
  %v156 = vsub.s32 0, %v155
  %v157 = vrot.slane %v152, %v156
  %v159 = vadd.f32 %v147, %v157
  %v160 = vsub.f32 0.0, %v159
  %v161 = vmul.f32 %v160, 1.442695
  %v162 = vpow.pop %v161
  %v163 = vadd.f32 %v162, 1.0
  %v164 = vrcp.pop %v163
  %v165 = vmul.f32 %v159, %v164
  %v166 = vpack.c.bf16 %v165, %v165
  %v167 = vld [vmem:[%s7] sm:$0xf]
  %v168 = vld [vmem:[%s7 + $0x4] sm:$0xf]
  %v169 = vld [vmem:[%s7 + $0x8] sm:$0xf]
  %v170 = vld [vmem:[%s7 + $0xc] sm:$0xf]
  %v171 = vld [vmem:[%s7 + $0x10] sm:$0xf]
  %v172 = vld [vmem:[%s7 + $0x14] sm:$0xf]
  %v173 = vld [vmem:[%s7 + $0x18] sm:$0xf]
  %v174 = vld [vmem:[%s7 + $0x1c] sm:$0xf]
  %v175 = vld [vmem:[%s7 + $0x20] sm:$0xf]
  %v176 = vld [vmem:[%s7 + $0x24] sm:$0xf]
  %v177 = vld [vmem:[%s7 + $0x28] sm:$0xf]
  %v178 = vld [vmem:[%s7 + $0x2c] sm:$0xf]
  %v179 = vld [vmem:[%s7 + $0x30] sm:$0xf]
  %v180 = vld [vmem:[%s7 + $0x34] sm:$0xf]
  %v181 = vld [vmem:[%s7 + $0x38] sm:$0xf]
  %v182 = vld [vmem:[%s7 + $0x3c] sm:$0xf]
  %v183 = vld [vmem:[%s8] sm:$0x1]
  %v185 = vlaneseq
  %v186 = vshrl.u32 %v185, 7
  %v187 = vsub.s32 0, %v186
  %v188 = vrot.slane %v183, %v187
  %v206 = vunpack.c.l.b16 %v167
  %v207 = vunpack.c.l.b16 %v168
  %v208 = vunpack.c.l.b16 %v169
  %v209 = vunpack.c.l.b16 %v170
  %v210 = vunpack.c.l.b16 %v171
  %v211 = vunpack.c.l.b16 %v172
  %v212 = vunpack.c.l.b16 %v173
  %v213 = vunpack.c.l.b16 %v174
  %v214 = vunpack.c.l.b16 %v175
  %v215 = vunpack.c.l.b16 %v176
  %v216 = vunpack.c.l.b16 %v177
  %v217 = vunpack.c.l.b16 %v178
  %v218 = vunpack.c.l.b16 %v179
  %v219 = vunpack.c.l.b16 %v180
  %v220 = vunpack.c.l.b16 %v181
  %v221 = vunpack.c.l.b16 %v182
  %v222 = vpack.c.b16 %v207, %v206
  %v223 = vpack.c.b16 %v209, %v208
  %v224 = vpack.c.b16 %v211, %v210
  %v225 = vpack.c.b16 %v213, %v212
  %v226 = vpack.c.b16 %v215, %v214
  %v227 = vpack.c.b16 %v217, %v216
  %v228 = vpack.c.b16 %v219, %v218
  %v229 = vpack.c.b16 %v221, %v220
  %238 = vmatprep.subr.bf16.mxu0 0
  %239 = vmatpush1.bf16.msra.mxu0 %v222
  %240 = vmatprep.subr.bf16.mxu0 0
  %241 = vmatpush1.bf16.msra.mxu0 %v223
  %242 = vmatprep.subr.bf16.mxu0 0
  %243 = vmatpush1.bf16.msra.mxu0 %v224
  %244 = vmatprep.subr.bf16.mxu0 0
  %245 = vmatpush1.bf16.msra.mxu0 %v225
  %246 = vmatprep.subr.bf16.mxu0 0
  %247 = vmatpush1.bf16.msra.mxu0 %v226
  %248 = vmatprep.subr.bf16.mxu0 0
  %249 = vmatpush1.bf16.msra.mxu0 %v227
  %250 = vmatprep.subr.bf16.mxu0 0
  %251 = vmatpush1.bf16.msra.mxu0 %v228
  %252 = vmatprep.subr.bf16.mxu0 0
  %253 = vmatpush1.bf16.msra.mxu0 %v229
  %254 = vmatprep.subr.bf16.mxu0 0
  %255 = vmatpush1.bf16.msra.mxu0 0
  %256 = vmatprep.subr.bf16.mxu0 0
  %257 = vmatpush1.bf16.msra.mxu0 0
  %258 = vmatprep.subr.bf16.mxu0 0
  %259 = vmatpush1.bf16.msra.mxu0 0
  %260 = vmatprep.subr.bf16.mxu0 0
  %261 = vmatpush1.bf16.msra.mxu0 0
  %262 = vmatprep.subr.bf16.mxu0 0
  %263 = vmatpush1.bf16.msra.mxu0 0
  %264 = vmatprep.subr.bf16.mxu0 0
  %265 = vmatpush1.bf16.msra.mxu0 0
  %266 = vmatprep.subr.bf16.mxu0 0
  %267 = vmatpush1.bf16.msra.mxu0 0
  %268 = vmatprep.subr.bf16.mxu0 0
  %269 = vmatpush1.bf16.msra.mxu0 0
  %270 = vmatprep.mubr.bf16.mxu0 0
  %271 = vmatmul.mubr.bf16.gmra.mrb[0].mxu0 %v166
  %v272 = vpop.f32.mrb[0].mxu0
  %v273 = vadd.f32 %v188, %v272
  %v274 = vpop.f32.mrb[0].mxu0
  %v275 = vpop.f32.mrb[0].mxu0
  %v276 = vpop.f32.mrb[0].mxu0
  %277 = vdwg.mxu0
  %v278 = vsub.f32 0.0, %v273
  %v279 = vmul.f32 %v278, 1.442695
  %v280 = vpow.pop %v279
  %v281 = vadd.f32 %v280, 1.0
  %v282 = vrcp.pop %v281
  %v283 = vmul.f32 %v273, %v282
  %v284 = vpack.c.bf16 %v283, %v283
  %v285 = vld [vmem:[%s9] sm:$0xf]
  %v286 = vld [vmem:[%s9 + $0x4] sm:$0xf]
  %v287 = vld [vmem:[%s9 + $0x8] sm:$0xf]
  %v288 = vld [vmem:[%s9 + $0xc] sm:$0xf]
  %v289 = vld [vmem:[%s9 + $0x10] sm:$0xf]
  %v290 = vld [vmem:[%s9 + $0x14] sm:$0xf]
  %v291 = vld [vmem:[%s9 + $0x18] sm:$0xf]
  %v292 = vld [vmem:[%s9 + $0x1c] sm:$0xf]
  %v293 = vld [vmem:[%s9 + $0x20] sm:$0xf]
  %v294 = vld [vmem:[%s9 + $0x24] sm:$0xf]
  %v295 = vld [vmem:[%s9 + $0x28] sm:$0xf]
  %v296 = vld [vmem:[%s9 + $0x2c] sm:$0xf]
  %v297 = vld [vmem:[%s9 + $0x30] sm:$0xf]
  %v298 = vld [vmem:[%s9 + $0x34] sm:$0xf]
  %v299 = vld [vmem:[%s9 + $0x38] sm:$0xf]
  %v300 = vld [vmem:[%s9 + $0x3c] sm:$0xf]
  %v301 = vld [vmem:[%s10] sm:$0x1]
  %v303 = vlaneseq
  %v304 = vshrl.u32 %v303, 7
  %v305 = vsub.s32 0, %v304
  %v306 = vrot.slane %v301, %v305
  %v324 = vunpack.c.l.b16 %v285
  %v325 = vunpack.c.l.b16 %v286
  %v326 = vunpack.c.l.b16 %v287
  %v327 = vunpack.c.l.b16 %v288
  %v328 = vunpack.c.l.b16 %v289
  %v329 = vunpack.c.l.b16 %v290
  %v330 = vunpack.c.l.b16 %v291
  %v331 = vunpack.c.l.b16 %v292
  %v332 = vunpack.c.l.b16 %v293
  %v333 = vunpack.c.l.b16 %v294
  %v334 = vunpack.c.l.b16 %v295
  %v335 = vunpack.c.l.b16 %v296
  %v336 = vunpack.c.l.b16 %v297
  %v337 = vunpack.c.l.b16 %v298
  %v338 = vunpack.c.l.b16 %v299
  %v339 = vunpack.c.l.b16 %v300
  %v340 = vpack.c.b16 %v325, %v324
  %v341 = vpack.c.b16 %v327, %v326
  %v342 = vpack.c.b16 %v329, %v328
  %v343 = vpack.c.b16 %v331, %v330
  %v344 = vpack.c.b16 %v333, %v332
  %v345 = vpack.c.b16 %v335, %v334
  %v346 = vpack.c.b16 %v337, %v336
  %v347 = vpack.c.b16 %v339, %v338
  %356 = vmatprep.subr.bf16.mxu0 0
  %357 = vmatpush1.bf16.msra.mxu0 %v340
  %358 = vmatprep.subr.bf16.mxu0 0
  %359 = vmatpush1.bf16.msra.mxu0 %v341
  %360 = vmatprep.subr.bf16.mxu0 0
  %361 = vmatpush1.bf16.msra.mxu0 %v342
  %362 = vmatprep.subr.bf16.mxu0 0
  %363 = vmatpush1.bf16.msra.mxu0 %v343
  %364 = vmatprep.subr.bf16.mxu0 0
  %365 = vmatpush1.bf16.msra.mxu0 %v344
  %366 = vmatprep.subr.bf16.mxu0 0
  %367 = vmatpush1.bf16.msra.mxu0 %v345
  %368 = vmatprep.subr.bf16.mxu0 0
  %369 = vmatpush1.bf16.msra.mxu0 %v346
  %370 = vmatprep.subr.bf16.mxu0 0
  %371 = vmatpush1.bf16.msra.mxu0 %v347
  %372 = vmatprep.subr.bf16.mxu0 0
  %373 = vmatpush1.bf16.msra.mxu0 0
  %374 = vmatprep.subr.bf16.mxu0 0
  %375 = vmatpush1.bf16.msra.mxu0 0
  %376 = vmatprep.subr.bf16.mxu0 0
  %377 = vmatpush1.bf16.msra.mxu0 0
  %378 = vmatprep.subr.bf16.mxu0 0
  %379 = vmatpush1.bf16.msra.mxu0 0
  %380 = vmatprep.subr.bf16.mxu0 0
  %381 = vmatpush1.bf16.msra.mxu0 0
  %382 = vmatprep.subr.bf16.mxu0 0
  %383 = vmatpush1.bf16.msra.mxu0 0
  %384 = vmatprep.subr.bf16.mxu0 0
  %385 = vmatpush1.bf16.msra.mxu0 0
  %386 = vmatprep.subr.bf16.mxu0 0
  %387 = vmatpush1.bf16.msra.mxu0 0
  %388 = vmatprep.mubr.bf16.mxu0 0
  %389 = vmatmul.mubr.bf16.gmra.mrb[0].mxu0 %v284
  %v390 = vpop.f32.mrb[0].mxu0
  %v391 = vadd.f32 %v306, %v390
  %v392 = vpop.f32.mrb[0].mxu0
  %v393 = vpop.f32.mrb[0].mxu0
  %v394 = vpop.f32.mrb[0].mxu0
  %395 = vdwg.mxu0
  %396 = vst.msk [vmem:[%s11] sm:$0xff] %vm104, %v391
  // Predicated region
  $region46: #{flownn_apply.1} parent=0 // pred_check
    _
  $region47: #{flownn_apply.1} parent=0 // pred_check_branch
    %398 = sbr.rel (0) target = $region49
  $region48: #{flownn_apply.1} parent=0 // pred_region
    _
  $region49: #{flownn_apply.1} parent=0 // pred_fallthru
    _
  // Predicated region
  $region50: #{flownn_apply.1} parent=0 // pred_check
    _
  $region51: #{flownn_apply.1} parent=0 // pred_check_branch
    %400 = sbr.rel (0) target = $region53
  $region52: #{flownn_apply.1} parent=0 // pred_region
    _
  $region53: #{flownn_apply.1} parent=0 // pred_fallthru
    _

</llo_original>
